<compile_context>
chip_gen: v5e
topology: v5e:2x2
jax: 0.10.0
libtpu: 0.0.40
codegen_flags: <defaults>
</compile_context>

<pallas_src>
import jax
import jax.numpy as jnp
from jax.experimental import pallas as pl
from jax.experimental.pallas import tpu as pltpu


def _mlp_kernel(x_ref, w1_ref, b1_ref, w2_ref, b2_ref, w3_ref, b3_ref, o_ref):
    # x tile: (2, tb) feature-major; batch dense on the lane axis.
    x = x_ref[...].astype(jnp.bfloat16)

    # Layer 1: (20,2) @ (2,tb) on the MXU.  K=2 pads inside the MXU; the
    # "wasted" push is free while the vector-extended slot has slack, and it
    # removes the old VALU broadcast-FMA chain entirely.
    h = jnp.dot(w1_ref[...], x, preferred_element_type=jnp.float32)
    h = jnp.maximum(h + b1_ref[...], 0.0).astype(jnp.bfloat16)        # (20, tb)

    # Layer 2: (20,20) @ (20,tb), bf16 operands, f32 accumulation.
    h = jnp.dot(w2_ref[...], h, preferred_element_type=jnp.float32)
    h = jnp.maximum(h + b2_ref[...], 0.0).astype(jnp.bfloat16)        # (20, tb)

    # Layer 3: (1,20) @ (20,tb) -> lane-dense (1, tb) unmasked stores.
    # TODO(synk): if profiling shows the vext/MXU slot binding rather than
    # VALU, pull this layer off the MXU (VPU multiply + sublane reduce).
    y = jnp.dot(w3_ref[...], h, preferred_element_type=jnp.float32)
    o_ref[...] = (y + b3_ref[...]).astype(o_ref.dtype)


def _pick_tile_b(n, cap=65536):
    """Largest 128-multiple divisor of n that is <= cap columns.

    Prefers an EVEN number of >=2 grid steps (megacore balance on v7x).  Falls
    back to the full batch when n is not 128-divisible (a block dim equal to
    the full array dim is always legal).
    """
    if n % 128 != 0:
        return n

    def largest_128_divisor(m):
        t = min(cap, m)
        t -= t % 128
        while t >= 128 and m % t != 0:
            t -= 128
        return t if t >= 128 else None

    if n % 256 == 0:
        t = largest_128_divisor(n // 2)   # tile | n/2  =>  n/tile is even (>=2)
        if t is not None:
            return t
    t = largest_128_divisor(n)
    return t if t is not None else n


def _padded_vmem_footprint(tile_b, x_itemsize=4, out_itemsize=4):
    """Double-buffered, sublane-padded VMEM bytes of the streamed operands.

    The (2, tile_b) x block and the (1, tile_b) out block are each stored
    padded to 8 sublanes, so each buffer costs 8*tile_b*itemsize, x2 buffers.
    Weights/biases add only a few KiB and are ignored.
    """
    return 2 * 8 * tile_b * x_itemsize + 2 * 8 * tile_b * out_itemsize


def simple_net_forward_fm(x_fm, params, *, tile_b=None, tile_b_cap=65536,
                          x_dtype=None):
    """Feature-major SimpleNet forward.

    x_fm:    (2, N)  rows = (abs_joint, joint_vel), batch on the last axis.
    params:  torch-style dict  w_l: (out, in) f32,  b_l: (out, 1) f32.
    returns: (1, N) float32  (reshape to (N, 1) is free -- same memory order).

    Matmuls use bf16 operands with f32 accumulation on the MXU, so results
    differ from a strict f32 torch forward at the ~1e-3 relative level.
    x_dtype=jnp.bfloat16 additionally streams x from HBM in bf16 (halves the
    dominant read stream; recommended on v5e, optional on v6e/v7x).

    tile_b_cap guidance (padded double-buffered footprint ~ 128*tile_b bytes):
      v5e <= ~64K cols (~8 MiB under the 16 MiB scoped default),
      v6e <= ~128K cols (~16 MiB under 32 MiB),
      v7x <= ~128K cols (32 MiB scoped of 64 MiB total; keep an even >=2 grid).
    """
    f_in, n = x_fm.shape
    assert f_in == 2
    if x_dtype is not None:
        x_fm = x_fm.astype(x_dtype)

    if tile_b is None:
        tile_b = _pick_tile_b(n, cap=tile_b_cap)
    assert n % tile_b == 0, "batch must be divisible by tile_b"
    assert tile_b == n or tile_b % 128 == 0, \
        "batch tile must be a multiple of 128 lanes (or the full batch)"

    # bf16 MXU operands (weights are tiny; cast once here).
    w1 = params["w1"].astype(jnp.bfloat16)
    w2 = params["w2"].astype(jnp.bfloat16)
    w3 = params["w3"].astype(jnp.bfloat16)
    b1 = params["b1"].astype(jnp.float32)
    b2 = params["b2"].astype(jnp.float32)
    b3 = params["b3"].astype(jnp.float32)

    h1, h2, f_out = w1.shape[0], w2.shape[0], w3.shape[0]
    grid = (n // tile_b,)

    def resident(shape):
        # Whole-array block with a grid-invariant index_map: the Pallas
        # pipeline elides re-copies when the block index is unchanged, so
        # these stay VMEM-resident for the whole grid.
        return pl.BlockSpec(shape, lambda i: tuple(0 for _ in shape))

    # Budget/report the tile against the *padded* double-buffered footprint,
    # and raise the scoped-VMEM hint only when it exceeds the most
    # conservative per-generation default.
    footprint = _padded_vmem_footprint(tile_b, x_itemsize=x_fm.dtype.itemsize)
    cp_kwargs = dict(dimension_semantics=("parallel",))
    if footprint > 12 * 1024 * 1024:
        cp_kwargs["vmem_limit_bytes"] = int(footprint + (4 << 20))

    out_fm = pl.pallas_call(
        _mlp_kernel,
        out_shape=jax.ShapeDtypeStruct((f_out, n), jnp.float32),
        grid_spec=pltpu.PrefetchScalarGridSpec(
            num_scalar_prefetch=0,
            grid=grid,
            in_specs=[
                pl.BlockSpec((f_in, tile_b), lambda i: (0, i)),   # x tile
                resident((h1, f_in)), resident((h1, 1)),          # layer 1
                resident((h2, h1)), resident((h2, 1)),            # layer 2
                resident((f_out, h2)), resident((f_out, 1)),      # layer 3
            ],
            out_specs=pl.BlockSpec((f_out, tile_b), lambda i: (0, i)),
        ),
        compiler_params=pltpu.CompilerParams(**cp_kwargs),
    )(x_fm, w1, b1, w2, b2, w3, b3)
    return out_fm


def simple_net_forward(x, params, **kw):
    """Torch-layout convenience wrapper: x (N, 2) -> (N, 1).

    NOTE: the (N,2)->(2,N) input transpose here is a separate XLA pass whose
    HBM traffic exceeds the kernel's own; prefer simple_net_forward_fm with
    feature-major data (the spec's source arrays are feature-major already).
    The output reshape is free ((1,N) and (N,1) share the same memory order).
    """
    n = x.shape[0]
    return simple_net_forward_fm(x.T, params, **kw).reshape(n, 1)


def init_params(key):
    """Deterministic synthetic params, torch Linear shapes: W (out,in), b (out,1)."""
    k1, k2, k3, k4, k5, k6 = jax.random.split(key, 6)

    def lin(kw, kb, fan_in, fan_out):
        bound = 1.0 / jnp.sqrt(fan_in)   # torch default U(-1/sqrt(fan_in), ...)
        w = jax.random.uniform(kw, (fan_out, fan_in), jnp.float32, -bound, bound)
        b = jax.random.uniform(kb, (fan_out, 1), jnp.float32, -bound, bound)
        return w, b

    w1, b1 = lin(k1, k2, 2, 20)
    w2, b2 = lin(k3, k4, 20, 20)
    w3, b3 = lin(k5, k6, 20, 1)
    return {"w1": w1, "b1": b1, "w2": w2, "b2": b2, "w3": w3, "b3": b3}


def _reference_fm(x_fm, p):
    """Pure-JAX f32 SimpleNet forward (torch semantics), feature-major (2,N)->(1,N)."""
    h = jnp.maximum(p["w1"] @ x_fm + p["b1"], 0.0)
    h = jnp.maximum(p["w2"] @ h + p["b2"], 0.0)
    return p["w3"] @ h + p["b3"]


if __name__ == "__main__":
    key = jax.random.PRNGKey(0)
    k_abs, k_vel, k_p = jax.random.split(key, 3)

    # Small batch of (abs_joint, joint_vel) samples, built feature-major the
    # same way the spec does (np.vstack((abs, vel))): shape (2, N).
    N = 2048
    x_abs = jax.random.normal(k_abs, (N,), dtype=jnp.float32)
    x_vel = jax.random.normal(k_vel, (N,), dtype=jnp.float32)
    x_fm = jnp.stack([x_abs, x_vel], axis=0)                 # (2, N)
    params = init_params(k_p)

    # Feature-major hot path: (2, N) -> (1, N), tile picker gives 2 even
    # 1024-column lane-dense grid steps here.
    out = jax.block_until_ready(simple_net_forward_fm(x_fm, params))
    assert out.shape == (1, N)

    ref = _reference_fm(x_fm, params)
    # bf16 MXU operands with f32 accumulation -> ~1e-3-level deviation vs the
    # strict-f32 torch forward; tolerance loosened accordingly.
    err = float(jnp.max(jnp.abs(out - ref)))
    assert jnp.allclose(out, ref, atol=2e-2, rtol=2e-2), err

    # Torch-layout compatibility path: (N, 2) -> (N, 1).
    out_nc = jax.block_until_ready(simple_net_forward(x_fm.T, params))
    assert out_nc.shape == (N, 1)
    assert jnp.allclose(out_nc, ref.reshape(N, 1), atol=2e-2, rtol=2e-2)

    print("KERNEL_OK")
</pallas_src>

<mosaic_0001>
module attributes {stable_mosaic.version = 11 : i64} {
  func.func @_mlp_kernel(%arg0: i32, %arg1: memref<2x1024xf32, #tpu.memory_space<vmem>>, %arg2: memref<20x2xbf16, #tpu.memory_space<vmem>>, %arg3: memref<20x1xf32, #tpu.memory_space<vmem>>, %arg4: memref<20x20xbf16, #tpu.memory_space<vmem>>, %arg5: memref<20x1xf32, #tpu.memory_space<vmem>>, %arg6: memref<1x20xbf16, #tpu.memory_space<vmem>>, %arg7: memref<1x1xf32, #tpu.memory_space<vmem>>, %arg8: memref<1x1024xf32, #tpu.memory_space<vmem>>) attributes {dimension_semantics = [#tpu.dimension_semantics<parallel>], iteration_bounds = array<i64: 2>, scalar_prefetch = 0 : i64, scratch_operands = 0 : i64, tpu.core_type = #tpu.core_type<tc>, window_params = [{transform_indices = @transform_0, window_bounds = array<i64: 2, 1024>}, {pipeline_mode = #tpu.pipeline_mode<synchronous>, transform_indices = @transform_1, window_bounds = array<i64: 20, 2>}, {pipeline_mode = #tpu.pipeline_mode<synchronous>, transform_indices = @transform_2, window_bounds = array<i64: 20, 1>}, {pipeline_mode = #tpu.pipeline_mode<synchronous>, transform_indices = @transform_3, window_bounds = array<i64: 20, 20>}, {pipeline_mode = #tpu.pipeline_mode<synchronous>, transform_indices = @transform_4, window_bounds = array<i64: 20, 1>}, {pipeline_mode = #tpu.pipeline_mode<synchronous>, transform_indices = @transform_5, window_bounds = array<i64: 1, 20>}, {pipeline_mode = #tpu.pipeline_mode<synchronous>, transform_indices = @transform_6, window_bounds = array<i64: 1, 1>}, {transform_indices = @transform_7, window_bounds = array<i64: 1, 1024>}]} {
    %c0 = arith.constant 0 : index
    %c0_0 = arith.constant 0 : index
    %0 = vector.load %arg1[%c0, %c0_0] : memref<2x1024xf32, #tpu.memory_space<vmem>>, vector<2x1024xf32>
    %1 = arith.truncf %0 : vector<2x1024xf32> to vector<2x1024xbf16>
    %c0_1 = arith.constant 0 : index
    %c0_2 = arith.constant 0 : index
    %2 = vector.load %arg2[%c0_1, %c0_2] : memref<20x2xbf16, #tpu.memory_space<vmem>>, vector<20x2xbf16>
    %cst = arith.constant dense<0.000000e+00> : vector<20x1024xf32>
    %3 = tpu.matmul %2, %1, %cst {dimension_numbers = #tpu.dot_dimension_numbers<[1], [0], [0], [1], [0, 0, 1, 1], [], []>} : vector<20x2xbf16>, vector<2x1024xbf16>, vector<20x1024xf32> -> vector<20x1024xf32>
    %c0_3 = arith.constant 0 : index
    %c0_4 = arith.constant 0 : index
    %4 = vector.load %arg3[%c0_3, %c0_4] : memref<20x1xf32, #tpu.memory_space<vmem>>, vector<20x1xf32>
    %5 = vector.broadcast %4 : vector<20x1xf32> to vector<20x1024xf32>
    %6 = arith.addf %3, %5 : vector<20x1024xf32>
    %cst_5 = arith.constant 0.000000e+00 : f32
    %7 = vector.broadcast %cst_5 : f32 to vector<20x1024xf32>
    %8 = arith.maximumf %6, %7 : vector<20x1024xf32>
    %9 = arith.truncf %8 : vector<20x1024xf32> to vector<20x1024xbf16>
    %c0_6 = arith.constant 0 : index
    %c0_7 = arith.constant 0 : index
    %10 = vector.load %arg4[%c0_6, %c0_7] : memref<20x20xbf16, #tpu.memory_space<vmem>>, vector<20x20xbf16>
    %cst_8 = arith.constant dense<0.000000e+00> : vector<20x1024xf32>
    %11 = tpu.matmul %10, %9, %cst_8 {dimension_numbers = #tpu.dot_dimension_numbers<[1], [0], [0], [1], [0, 0, 1, 1], [], []>} : vector<20x20xbf16>, vector<20x1024xbf16>, vector<20x1024xf32> -> vector<20x1024xf32>
    %c0_9 = arith.constant 0 : index
    %c0_10 = arith.constant 0 : index
    %12 = vector.load %arg5[%c0_9, %c0_10] : memref<20x1xf32, #tpu.memory_space<vmem>>, vector<20x1xf32>
    %13 = vector.broadcast %12 : vector<20x1xf32> to vector<20x1024xf32>
    %14 = arith.addf %11, %13 : vector<20x1024xf32>
    %cst_11 = arith.constant 0.000000e+00 : f32
    %15 = vector.broadcast %cst_11 : f32 to vector<20x1024xf32>
    %16 = arith.maximumf %14, %15 : vector<20x1024xf32>
    %17 = arith.truncf %16 : vector<20x1024xf32> to vector<20x1024xbf16>
    %c0_12 = arith.constant 0 : index
    %c0_13 = arith.constant 0 : index
    %18 = vector.load %arg6[%c0_12, %c0_13] : memref<1x20xbf16, #tpu.memory_space<vmem>>, vector<1x20xbf16>
    %cst_14 = arith.constant dense<0.000000e+00> : vector<1x1024xf32>
    %19 = tpu.matmul %18, %17, %cst_14 {dimension_numbers = #tpu.dot_dimension_numbers<[1], [0], [0], [1], [0, 0, 1, 1], [], []>} : vector<1x20xbf16>, vector<20x1024xbf16>, vector<1x1024xf32> -> vector<1x1024xf32>
    %c0_15 = arith.constant 0 : index
    %c0_16 = arith.constant 0 : index
    %20 = vector.load %arg7[%c0_15, %c0_16] : memref<1x1xf32, #tpu.memory_space<vmem>>, vector<1x1xf32>
    %21 = vector.broadcast %20 : vector<1x1xf32> to vector<1x1024xf32>
    %22 = arith.addf %19, %21 : vector<1x1024xf32>
    %c0_17 = arith.constant 0 : index
    %c0_18 = arith.constant 0 : index
    %23 = vector.load %arg8[%c0_17, %c0_18] : memref<1x1024xf32, #tpu.memory_space<vmem>>, vector<1x1024xf32>
    tpu.vector_store %arg8[%c0_17, %c0_18], %22 {strides = array<i32>} : memref<1x1024xf32, #tpu.memory_space<vmem>>, vector<1x1024xf32>,
    return
  }
  func.func @transform_0(%arg0: i32) -> (i32, i32) {
    %c0_i32 = arith.constant 0 : i32
    %c0_i32_0 = arith.constant 0 : i32
    return %c0_i32, %arg0 : i32, i32
  }
  func.func @transform_1(%arg0: i32) -> (i32, i32) {
    %c0_i32 = arith.constant 0 : i32
    %c0_i32_0 = arith.constant 0 : i32
    %c0_i32_1 = arith.constant 0 : i32
    return %c0_i32, %c0_i32_0 : i32, i32
  }
  func.func @transform_2(%arg0: i32) -> (i32, i32) {
    %c0_i32 = arith.constant 0 : i32
    %c0_i32_0 = arith.constant 0 : i32
    %c0_i32_1 = arith.constant 0 : i32
    return %c0_i32, %c0_i32_0 : i32, i32
  }
  func.func @transform_3(%arg0: i32) -> (i32, i32) {
    %c0_i32 = arith.constant 0 : i32
    %c0_i32_0 = arith.constant 0 : i32
    %c0_i32_1 = arith.constant 0 : i32
    return %c0_i32, %c0_i32_0 : i32, i32
  }
  func.func @transform_4(%arg0: i32) -> (i32, i32) {
    %c0_i32 = arith.constant 0 : i32
    %c0_i32_0 = arith.constant 0 : i32
    %c0_i32_1 = arith.constant 0 : i32
    return %c0_i32, %c0_i32_0 : i32, i32
  }
  func.func @transform_5(%arg0: i32) -> (i32, i32) {
    %c0_i32 = arith.constant 0 : i32
    %c0_i32_0 = arith.constant 0 : i32
    %c0_i32_1 = arith.constant 0 : i32
    return %c0_i32, %c0_i32_0 : i32, i32
  }
  func.func @transform_6(%arg0: i32) -> (i32, i32) {
    %c0_i32 = arith.constant 0 : i32
    %c0_i32_0 = arith.constant 0 : i32
    %c0_i32_1 = arith.constant 0 : i32
    return %c0_i32, %c0_i32_0 : i32, i32
  }
  func.func @transform_7(%arg0: i32) -> (i32, i32) {
    %c0_i32 = arith.constant 0 : i32
    %c0_i32_0 = arith.constant 0 : i32
    return %c0_i32, %arg0 : i32, i32
  }
}

</mosaic_0001>

<llo_original>
// kernel: tpu_custom_call.1
$region0: #{tpu_custom_call.1}
  #allocation0 [shape = 'u32[]', space=smem, size = 0x4, offset = 0x4, fixed_abs, tag = 'smem constant byte address 0x4 - core index']
  #allocation1 [shape = 'u32[72,128]{1,0:T(1,128)}', space=vmem, size = 0x9000, scoped, tag = 'internal scratch']
  #allocation2 [shape = 'f32[1,1]{1,0:T(1,128)S(1)}', space=vmem, size = 0x200, scoped, tag = 'scoped memory for tpu_custom_call.1']
  %s0 = inlined_call_operand.vmem [shape: f32[2,2048], index: 0, kind: input, shape index: {}]
  %s1 = inlined_call_operand.vmem [shape: bf16[20,2], index: 1, kind: input, shape index: {}]
  %s2 = inlined_call_operand.vmem [shape: f32[20,1], index: 2, kind: input, shape index: {}]
  %s3 = inlined_call_operand.vmem [shape: bf16[20,20], index: 3, kind: input, shape index: {}]
  %s4 = inlined_call_operand.vmem [shape: f32[20,1], index: 4, kind: input, shape index: {}]
  %s5 = inlined_call_operand.vmem [shape: bf16[1,20], index: 5, kind: input, shape index: {}]
  %s6 = inlined_call_operand.<no memory space> [shape: f32[1,1], index: 6, kind: input, shape index: {}]
  %s7 = inlined_call_operand.hbm [shape: f32[1,2048], index: 7, kind: output, shape index: {}]
  %s8 = sld [smem:[#allocation0]]
  $region61: #{tpu_custom_call.1} parent=0
    _
  %s10 = ssub.s32 1, %s8
  %s11 = scalar_select 0, %s10, %s8
  %v12 = vstv %s6
  %13 = vst [vmem:[#allocation2] sm:$0x1] %v12
  $region1: #{tpu_custom_call.1} parent=0
    #allocation3 [shape = 'u8[8192]{0}', space=vmem, size = 0x2000, scoped, tag = 'output window, operand 0']
    #allocation4 [shape = 's32[2]{0}', space=sflag, size = 0x8, scoped, tag = 'scoped memory for tpu_custom_call.1']
    %14 = vsyncpa [#allocation4], 0
    %s15 = scalar_lea.sflag [#allocation4], 1
    %16 = vsyncpa %s15, 0
    loop: start=0, step=1, limit=4
    $region2: #{tpu_custom_call.1} parent=1 // loop_pre_header
      _
    $region3: #{tpu_custom_call.1} parent=1 // loop_header
      %s18 = sphi 0, %s22
      %p19 = scmp.ge.s32.totalorder %s18, 4
      %s28 = sphi 0, %s30
      %s31 = sphi 0, %s28
      %s32 = sphi 0, %s31
      %s48 = sphi 0, %s32
      %s52 = sphi 0, %s52
      %s54 = sphi 0, %s52
      %s55 = sphi 0, %s54
      %s69 = sphi 0, %s55
      %s73 = sphi 0, %s73
      %s75 = sphi 0, %s73
      %s76 = sphi 0, %s75
      %s90 = sphi 0, %s76
      %s94 = sphi 0, %s94
      %s96 = sphi 0, %s94
      %s97 = sphi 0, %s96
      %s111 = sphi 0, %s97
      %s115 = sphi 0, %s115
      %s117 = sphi 0, %s115
      %s118 = sphi 0, %s117
      %s132 = sphi 0, %s118
      %s136 = sphi 0, %s136
      %s138 = sphi 0, %s136
      %s139 = sphi 0, %s138
      %s153 = sphi 0, %s139
      %s157 = sphi 0, %s157
      %s159 = sphi 0, %s157
      %s160 = sphi 0, %s159
      %s174 = sphi 0, %s160
      %s180 = sphi 0, %s182
      %s183 = sphi 0, %s180
      %s184 = sphi 0, %s183
      %s200 = sphi 0, %s184
    $region4: #{tpu_custom_call.1} parent=1 // loop_header_branch
      %21 = sbr.rel (%p19) target = $region8
    $region5: #{tpu_custom_call.1} parent=1 // loop_body
      %s23 = ssub.s32 %s18, 1
      %s24 = ssub.s32 %s18, 2
      %s25 = sadd.s32 %s18, 1
      %s26 = ssub.s32 %s18, %s25
      %p27 = scmp.eq.s32.totalorder %s26, 0
      %s29 = sadd.s32 %s28, 1
      %s30 = scalar_select %p27, %s28, %s29
      %p33 = pneg %p27
      %p34 = scmp.eq.s32.totalorder %s18, 1
      %p35 = por %p33, %p34
      %p36 = scmp.ne.s32.totalorder %s28, %s31
      %p37 = scmp.eq.s32.totalorder %s18, 0
      %p38 = por %p36, %p37
      %p39 = scmp.ne.s32.totalorder %s28, %s31
      %p40 = scmp.eq.s32.totalorder %s23, 1
      %p41 = por %p39, %p40
      %p42 = scmp.ne.s32.totalorder %s31, %s32
      %p43 = scmp.eq.s32.totalorder %s23, 0
      %p44 = por %p42, %p43
      %p45 = scmp.ne.s32.totalorder %s31, %s32
      %p46 = scmp.eq.s32.totalorder %s24, 1
      %p47 = por %p45, %p46
      %p49 = scmp.ne.s32.totalorder %s32, %s48
      %p50 = scmp.eq.s32.totalorder %s24, 0
      %p51 = por %p49, %p50
      %s53 = sadd.s32 %s52, 1
      %p56 = scmp.eq.s32.totalorder %s18, 1
      %p57 = scmp.ne.s32.totalorder %s52, %s54
      %p58 = scmp.eq.s32.totalorder %s18, 0
      %p59 = por %p57, %p58
      %p60 = scmp.ne.s32.totalorder %s52, %s54
      %p61 = scmp.eq.s32.totalorder %s23, 1
      %p62 = por %p60, %p61
      %p63 = scmp.ne.s32.totalorder %s54, %s55
      %p64 = scmp.eq.s32.totalorder %s23, 0
      %p65 = por %p63, %p64
      %p66 = scmp.ne.s32.totalorder %s54, %s55
      %p67 = scmp.eq.s32.totalorder %s24, 1
      %p68 = por %p66, %p67
      %p70 = scmp.ne.s32.totalorder %s55, %s69
      %p71 = scmp.eq.s32.totalorder %s24, 0
      %p72 = por %p70, %p71
      %s74 = sadd.s32 %s73, 1
      %p77 = scmp.eq.s32.totalorder %s18, 1
      %p78 = scmp.ne.s32.totalorder %s73, %s75
      %p79 = scmp.eq.s32.totalorder %s18, 0
      %p80 = por %p78, %p79
      %p81 = scmp.ne.s32.totalorder %s73, %s75
      %p82 = scmp.eq.s32.totalorder %s23, 1
      %p83 = por %p81, %p82
      %p84 = scmp.ne.s32.totalorder %s75, %s76
      %p85 = scmp.eq.s32.totalorder %s23, 0
      %p86 = por %p84, %p85
      %p87 = scmp.ne.s32.totalorder %s75, %s76
      %p88 = scmp.eq.s32.totalorder %s24, 1
      %p89 = por %p87, %p88
      %p91 = scmp.ne.s32.totalorder %s76, %s90
      %p92 = scmp.eq.s32.totalorder %s24, 0
      %p93 = por %p91, %p92
      %s95 = sadd.s32 %s94, 1
      %p98 = scmp.eq.s32.totalorder %s18, 1
      %p99 = scmp.ne.s32.totalorder %s94, %s96
      %p100 = scmp.eq.s32.totalorder %s18, 0
      %p101 = por %p99, %p100
      %p102 = scmp.ne.s32.totalorder %s94, %s96
      %p103 = scmp.eq.s32.totalorder %s23, 1
      %p104 = por %p102, %p103
      %p105 = scmp.ne.s32.totalorder %s96, %s97
      %p106 = scmp.eq.s32.totalorder %s23, 0
      %p107 = por %p105, %p106
      %p108 = scmp.ne.s32.totalorder %s96, %s97
      %p109 = scmp.eq.s32.totalorder %s24, 1
      %p110 = por %p108, %p109
      %p112 = scmp.ne.s32.totalorder %s97, %s111
      %p113 = scmp.eq.s32.totalorder %s24, 0
      %p114 = por %p112, %p113
      %s116 = sadd.s32 %s115, 1
      %p119 = scmp.eq.s32.totalorder %s18, 1
      %p120 = scmp.ne.s32.totalorder %s115, %s117
      %p121 = scmp.eq.s32.totalorder %s18, 0
      %p122 = por %p120, %p121
      %p123 = scmp.ne.s32.totalorder %s115, %s117
      %p124 = scmp.eq.s32.totalorder %s23, 1
      %p125 = por %p123, %p124
      %p126 = scmp.ne.s32.totalorder %s117, %s118
      %p127 = scmp.eq.s32.totalorder %s23, 0
      %p128 = por %p126, %p127
      %p129 = scmp.ne.s32.totalorder %s117, %s118
      %p130 = scmp.eq.s32.totalorder %s24, 1
      %p131 = por %p129, %p130
      %p133 = scmp.ne.s32.totalorder %s118, %s132
      %p134 = scmp.eq.s32.totalorder %s24, 0
      %p135 = por %p133, %p134
      %s137 = sadd.s32 %s136, 1
      %p140 = scmp.eq.s32.totalorder %s18, 1
      %p141 = scmp.ne.s32.totalorder %s136, %s138
      %p142 = scmp.eq.s32.totalorder %s18, 0
      %p143 = por %p141, %p142
      %p144 = scmp.ne.s32.totalorder %s136, %s138
      %p145 = scmp.eq.s32.totalorder %s23, 1
      %p146 = por %p144, %p145
      %p147 = scmp.ne.s32.totalorder %s138, %s139
      %p148 = scmp.eq.s32.totalorder %s23, 0
      %p149 = por %p147, %p148
      %p150 = scmp.ne.s32.totalorder %s138, %s139
      %p151 = scmp.eq.s32.totalorder %s24, 1
      %p152 = por %p150, %p151
      %p154 = scmp.ne.s32.totalorder %s139, %s153
      %p155 = scmp.eq.s32.totalorder %s24, 0
      %p156 = por %p154, %p155
      %s158 = sadd.s32 %s157, 1
      %p161 = scmp.eq.s32.totalorder %s18, 1
      %p162 = scmp.ne.s32.totalorder %s157, %s159
      %p163 = scmp.eq.s32.totalorder %s18, 0
      %p164 = por %p162, %p163
      %p165 = scmp.ne.s32.totalorder %s157, %s159
      %p166 = scmp.eq.s32.totalorder %s23, 1
      %p167 = por %p165, %p166
      %p168 = scmp.ne.s32.totalorder %s159, %s160
      %p169 = scmp.eq.s32.totalorder %s23, 0
      %p170 = por %p168, %p169
      %p171 = scmp.ne.s32.totalorder %s159, %s160
      %p172 = scmp.eq.s32.totalorder %s24, 1
      %p173 = por %p171, %p172
      %p175 = scmp.ne.s32.totalorder %s160, %s174
      %p176 = scmp.eq.s32.totalorder %s24, 0
      %p177 = por %p175, %p176
      %s178 = ssub.s32 %s18, %s25
      %p179 = scmp.eq.s32.totalorder %s178, 0
      %s181 = sadd.s32 %s180, 1
      %s182 = scalar_select %p179, %s180, %s181
      %p185 = pneg %p179
      %p186 = scmp.eq.s32.totalorder %s18, 1
      %p187 = por %p185, %p186
      %p188 = scmp.ne.s32.totalorder %s180, %s183
      %p189 = scmp.eq.s32.totalorder %s18, 0
      %p190 = por %p188, %p189
      %p191 = scmp.ne.s32.totalorder %s180, %s183
      %p192 = scmp.eq.s32.totalorder %s23, 1
      %p193 = por %p191, %p192
      %p194 = scmp.ne.s32.totalorder %s183, %s184
      %p195 = scmp.eq.s32.totalorder %s23, 0
      %p196 = por %p194, %p195
      %p197 = scmp.ne.s32.totalorder %s183, %s184
      %p198 = scmp.eq.s32.totalorder %s24, 1
      %p199 = por %p197, %p198
      %p201 = scmp.ne.s32.totalorder %s184, %s200
      %p202 = scmp.eq.s32.totalorder %s24, 0
      %p203 = por %p201, %p202
      %p204 = scmp.le.s32.totalorder 1, %s18
      %p205 = scmp.lt.s32.totalorder %s18, 3
      %p206 = pnand %p204, %p205
      %p207 = pneg %p206
      // Predicated region
      $region9: #{tpu_custom_call.1} parent=5 // pred_check
        _
      $region10: #{tpu_custom_call.1} parent=5 // pred_check_branch
        %209 = sbr.rel (%p206) target = $region12
      $region11: #{tpu_custom_call.1} parent=5 // pred_region
        %s210 = ssub.s32 %s18, 1
        // Predicated region
        $region13: #{tpu_custom_call.1} parent=11 // pred_check
          %p211 = pneg %p65
        $region14: #{tpu_custom_call.1} parent=11 // pred_check_branch
          %213 = sbr.rel (%p211) target = $region16
        $region15: #{tpu_custom_call.1} parent=11 // pred_region
          _
        $region16: #{tpu_custom_call.1} parent=11 // pred_fallthru
          _
        // Predicated region
        $region17: #{tpu_custom_call.1} parent=11 // pred_check
          %p214 = pneg %p86
        $region18: #{tpu_custom_call.1} parent=11 // pred_check_branch
          %216 = sbr.rel (%p214) target = $region20
        $region19: #{tpu_custom_call.1} parent=11 // pred_region
          _
        $region20: #{tpu_custom_call.1} parent=11 // pred_fallthru
          _
        // Predicated region
        $region21: #{tpu_custom_call.1} parent=11 // pred_check
          %p217 = pneg %p107
        $region22: #{tpu_custom_call.1} parent=11 // pred_check_branch
          %219 = sbr.rel (%p217) target = $region24
        $region23: #{tpu_custom_call.1} parent=11 // pred_region
          _
        $region24: #{tpu_custom_call.1} parent=11 // pred_fallthru
          _
        // Predicated region
        $region25: #{tpu_custom_call.1} parent=11 // pred_check
          %p220 = pneg %p128
        $region26: #{tpu_custom_call.1} parent=11 // pred_check_branch
          %222 = sbr.rel (%p220) target = $region28
        $region27: #{tpu_custom_call.1} parent=11 // pred_region
          _
        $region28: #{tpu_custom_call.1} parent=11 // pred_fallthru
          _
        // Predicated region
        $region29: #{tpu_custom_call.1} parent=11 // pred_check
          %p223 = pneg %p149
        $region30: #{tpu_custom_call.1} parent=11 // pred_check_branch
          %225 = sbr.rel (%p223) target = $region32
        $region31: #{tpu_custom_call.1} parent=11 // pred_region
          _
        $region32: #{tpu_custom_call.1} parent=11 // pred_fallthru
          _
        // Predicated region
        $region33: #{tpu_custom_call.1} parent=11 // pred_check
          %p226 = pneg %p170
        $region34: #{tpu_custom_call.1} parent=11 // pred_check_branch
          %228 = sbr.rel (%p226) target = $region36
        $region35: #{tpu_custom_call.1} parent=11 // pred_region
          _
        $region36: #{tpu_custom_call.1} parent=11 // pred_fallthru
          _
      $region12: #{tpu_custom_call.1} parent=5 // pred_fallthru
        _
      %p229 = scmp.lt.s32.totalorder %s18, 2
      // Predicated region
      $region37: #{tpu_custom_call.1} parent=5 // pred_check
        %p230 = pneg %p229
      $region38: #{tpu_custom_call.1} parent=5 // pred_check_branch
        %232 = sbr.rel (%p230) target = $region40
      $region39: #{tpu_custom_call.1} parent=5 // pred_region
        // Predicated region
        $region41: #{tpu_custom_call.1} parent=39 // pred_check
          %p233 = pneg %p38
        $region42: #{tpu_custom_call.1} parent=39 // pred_check_branch
          %235 = sbr.rel (%p233) target = $region44
        $region43: #{tpu_custom_call.1} parent=39 // pred_region
          %s236 = smul.u32 8, %s18
          %p237 = scmp.lt.s32.totalorder %s236, 15
          %s238 = scalar_select %p237, %s236, 15
          %s239 = smul.addr %s238, 2
          %s240 = scalar_lea.vmem %s0, %s239
          %s241 = smul.u32 8, %s18
        $region44: #{tpu_custom_call.1} parent=39 // pred_fallthru
          _
      $region40: #{tpu_custom_call.1} parent=5 // pred_fallthru
        _
      %p242 = scmp.le.s32.totalorder 1, %s18
      %p243 = scmp.lt.s32.totalorder %s18, 3
      %p244 = pnand %p242, %p243
      %p245 = pneg %p244
      // Predicated region
      $region45: #{tpu_custom_call.1} parent=5 // pred_check
        _
      $region46: #{tpu_custom_call.1} parent=5 // pred_check_branch
        %247 = sbr.rel (%p244) target = $region48
      $region47: #{tpu_custom_call.1} parent=5 // pred_region
        %s248 = ssub.s32 %s18, 1
        %s249 = smul.u32 8, %s23
        %p250 = scmp.lt.s32.totalorder %s249, 15
        %s251 = scalar_select %p250, %s249, 15
        %s252 = smul.addr %s251, 2
        %s253 = scalar_lea.vmem %s0, %s252
        %p254 = pneg %p44
        %p255 = pneg %p41
        %p256 = pneg %p65
        %p257 = pneg %p62
        %p258 = pneg %p86
        %p259 = pneg %p83
        %p260 = pneg %p107
        %p261 = pneg %p104
        %p262 = pneg %p128
        %p263 = pneg %p125
        %p264 = pneg %p149
        %p265 = pneg %p146
        %p266 = pneg %p170
        %p267 = pneg %p167
        %p268 = pneg %p196
        %p269 = pneg %p193
        %s270 = sand.u32 %s183, 1
        %s271 = scalar_lea.sflag [#allocation4], %s270
        %s272 = sand.u32 %s183, 1
        %s273 = smul.addr %s272, 8
        %s274 = scalar_lea.vmem [#allocation3], %s273
        %s275 = smul.u32 8, %s23
        %p276 = scmp.lt.s32.totalorder %s275, 15
        %s277 = scalar_select %p276, %s275, 15
        %s278 = smul.addr %s277, 2
        %s279 = scalar_lea.vmem %s0, %s278
        %s280 = smul.u32 8, %s23
        %s281 = smul.u32 8, %s23
        %v283 = vld [vmem:[%s279] sm:$0xff]
        %v284 = vld [vmem:[%s279 + $0x8] sm:$0xff]
        %287 = vst [vmem:[#allocation1] ss:$4 sm:$0xff] %v283
        %s288 = scalar_lea.vmem [#allocation1], 32
        %289 = vst [vmem:[%s288] ss:$4 sm:$0xff] %v284
        %v290 = vld.sshfl [vmem:[#allocation1] sm:$0xff pattern:$0x73625140]
        %v291 = vld.sshfl [vmem:[#allocation1 + $0x8] sm:$0xff pattern:$0x73625140]
        %v292 = vld.sshfl [vmem:[#allocation1 + $0x10] sm:$0xff pattern:$0x73625140]
        %v293 = vld.sshfl [vmem:[#allocation1 + $0x18] sm:$0xff pattern:$0x73625140]
        %v294 = vld.sshfl [vmem:[#allocation1 + $0x20] sm:$0xff pattern:$0x73625140]
        %v295 = vld.sshfl [vmem:[#allocation1 + $0x28] sm:$0xff pattern:$0x73625140]
        %v296 = vld.sshfl [vmem:[#allocation1 + $0x30] sm:$0xff pattern:$0x73625140]
        %v297 = vld.sshfl [vmem:[#allocation1 + $0x38] sm:$0xff pattern:$0x73625140]
        %v306 = vpack.c.bf16 %v290, %v290
        %v307 = vpack.c.bf16 %v291, %v291
        %v308 = vpack.c.bf16 %v292, %v292
        %v309 = vpack.c.bf16 %v293, %v293
        %v310 = vpack.c.bf16 %v294, %v294
        %v311 = vpack.c.bf16 %v295, %v295
        %v312 = vpack.c.bf16 %v296, %v296
        %v313 = vpack.c.bf16 %v297, %v297
        %v314 = vld [vmem:[%s1] sm:$0xf]
        %v315 = vld [vmem:[%s1 + $0x4] sm:$0xf]
        %v316 = vld [vmem:[%s1 + $0x8] sm:$0x3]
        %v317 = vld [vmem:[%s2] sm:$0xff]
        %v318 = vld [vmem:[%s2 + $0x8] sm:$0xff]
        %v319 = vld [vmem:[%s2 + $0x10] sm:$0xf]
        %321 = vset.pattern.permute.xlu0 0
        %322 = vperm.xlu0 %321, %v317
        %v323 = vpop.permute.xlu0 %322
        %326 = vset.pattern.permute.xlu0 0
        %327 = vperm.xlu0 %326, %v318
        %v328 = vpop.permute.xlu0 %327
        %331 = vset.pattern.permute.xlu0 0
        %332 = vperm.xlu0 %331, %v319
        %v333 = vpop.permute.xlu0 %332
        %v338 = vunpack.c.l.b16 %v314
        %v339 = vunpack.c.l.b16 %v315
        %v340 = vunpack.c.l.b16 %v316
        %v341 = vpack.c.b16 %v339, %v338
        %v342 = vpack.c.b16 %v340, %v340
        %vm343 = vcmask 15360
        %v345 = vsel %vm343, %v341, 0
        %v348 = vsel %vm343, %v342, 0
        %vm350 = vcmask 1040384
        %v352 = vsel %vm350, %v306, 0
        %v355 = vsel %vm350, %v307, 0
        %v358 = vsel %vm350, %v308, 0
        %v361 = vsel %vm350, %v309, 0
        %v364 = vsel %vm350, %v310, 0
        %v367 = vsel %vm350, %v311, 0
        %v370 = vsel %vm350, %v312, 0
        %v373 = vsel %vm350, %v313, 0
        %375 = vmatpush.bf16.msra.mxu0 0
        %376 = vmatpush.bf16.msra.mxu0 0
        %377 = vmatpush.bf16.msra.mxu0 0
        %378 = vmatpush.bf16.msra.mxu0 0
        %379 = vmatpush.bf16.msra.mxu0 0
        %380 = vmatpush.bf16.msra.mxu0 0
        %381 = vmatpush.bf16.msra.mxu0 0
        %382 = vmatpush.bf16.msra.mxu0 %v352
        %383 = vmatmul.bf16.gmra.mxu0 %v345
        %v384 = vpop.f32.mrf.mxu0
        %v385 = vadd.f32 %v323, %v384
        %v386 = vpop.f32.mrf.mxu0
        %v387 = vadd.f32 %v328, %v386
        %388 = vmatmul.bf16.gmra.mxu0 %v348
        %v389 = vpop.f32.mrf.mxu0
        %v390 = vadd.f32 %v333, %v389
        %v391 = vpop.f32.mrf.mxu0
        %392 = vdwg.mxu0
        %393 = vmatpush.bf16.msra.mxu0 0
        %394 = vmatpush.bf16.msra.mxu0 0
        %395 = vmatpush.bf16.msra.mxu0 0
        %396 = vmatpush.bf16.msra.mxu0 0
        %397 = vmatpush.bf16.msra.mxu0 0
        %398 = vmatpush.bf16.msra.mxu0 0
        %399 = vmatpush.bf16.msra.mxu0 0
        %400 = vmatpush.bf16.msra.mxu0 %v355
        %401 = vmatmul.bf16.gmra.mxu0 %v345
        %v402 = vpop.f32.mrf.mxu0
        %v403 = vadd.f32 %v323, %v402
        %v404 = vpop.f32.mrf.mxu0
        %v405 = vadd.f32 %v328, %v404
        %406 = vmatmul.bf16.gmra.mxu0 %v348
        %v407 = vpop.f32.mrf.mxu0
        %v408 = vadd.f32 %v333, %v407
        %v409 = vpop.f32.mrf.mxu0
        %410 = vdwg.mxu0
        %411 = vmatpush.bf16.msra.mxu0 0
        %412 = vmatpush.bf16.msra.mxu0 0
        %413 = vmatpush.bf16.msra.mxu0 0
        %414 = vmatpush.bf16.msra.mxu0 0
        %415 = vmatpush.bf16.msra.mxu0 0
        %416 = vmatpush.bf16.msra.mxu0 0
        %417 = vmatpush.bf16.msra.mxu0 0
        %418 = vmatpush.bf16.msra.mxu0 %v358
        %419 = vmatmul.bf16.gmra.mxu0 %v345
        %v420 = vpop.f32.mrf.mxu0
        %v421 = vadd.f32 %v323, %v420
        %v422 = vpop.f32.mrf.mxu0
        %v423 = vadd.f32 %v328, %v422
        %424 = vmatmul.bf16.gmra.mxu0 %v348
        %v425 = vpop.f32.mrf.mxu0
        %v426 = vadd.f32 %v333, %v425
        %v427 = vpop.f32.mrf.mxu0
        %428 = vdwg.mxu0
        %429 = vmatpush.bf16.msra.mxu0 0
        %430 = vmatpush.bf16.msra.mxu0 0
        %431 = vmatpush.bf16.msra.mxu0 0
        %432 = vmatpush.bf16.msra.mxu0 0
        %433 = vmatpush.bf16.msra.mxu0 0
        %434 = vmatpush.bf16.msra.mxu0 0
        %435 = vmatpush.bf16.msra.mxu0 0
        %436 = vmatpush.bf16.msra.mxu0 %v361
        %437 = vmatmul.bf16.gmra.mxu0 %v345
        %v438 = vpop.f32.mrf.mxu0
        %v439 = vadd.f32 %v323, %v438
        %v440 = vpop.f32.mrf.mxu0
        %v441 = vadd.f32 %v328, %v440
        %442 = vmatmul.bf16.gmra.mxu0 %v348
        %v443 = vpop.f32.mrf.mxu0
        %v444 = vadd.f32 %v333, %v443
        %v445 = vpop.f32.mrf.mxu0
        %446 = vdwg.mxu0
        %447 = vmatpush.bf16.msra.mxu0 0
        %448 = vmatpush.bf16.msra.mxu0 0
        %449 = vmatpush.bf16.msra.mxu0 0
        %450 = vmatpush.bf16.msra.mxu0 0
        %451 = vmatpush.bf16.msra.mxu0 0
        %452 = vmatpush.bf16.msra.mxu0 0
        %453 = vmatpush.bf16.msra.mxu0 0
        %454 = vmatpush.bf16.msra.mxu0 %v364
        %455 = vmatmul.bf16.gmra.mxu0 %v345
        %v456 = vpop.f32.mrf.mxu0
        %v457 = vadd.f32 %v323, %v456
        %v458 = vpop.f32.mrf.mxu0
        %v459 = vadd.f32 %v328, %v458
        %460 = vmatmul.bf16.gmra.mxu0 %v348
        %v461 = vpop.f32.mrf.mxu0
        %v462 = vadd.f32 %v333, %v461
        %v463 = vpop.f32.mrf.mxu0
        %464 = vdwg.mxu0
        %465 = vmatpush.bf16.msra.mxu0 0
        %466 = vmatpush.bf16.msra.mxu0 0
        %467 = vmatpush.bf16.msra.mxu0 0
        %468 = vmatpush.bf16.msra.mxu0 0
        %469 = vmatpush.bf16.msra.mxu0 0
        %470 = vmatpush.bf16.msra.mxu0 0
        %471 = vmatpush.bf16.msra.mxu0 0
        %472 = vmatpush.bf16.msra.mxu0 %v367
        %473 = vmatmul.bf16.gmra.mxu0 %v345
        %v474 = vpop.f32.mrf.mxu0
        %v475 = vadd.f32 %v323, %v474
        %v476 = vpop.f32.mrf.mxu0
        %v477 = vadd.f32 %v328, %v476
        %478 = vmatmul.bf16.gmra.mxu0 %v348
        %v479 = vpop.f32.mrf.mxu0
        %v480 = vadd.f32 %v333, %v479
        %v481 = vpop.f32.mrf.mxu0
        %482 = vdwg.mxu0
        %483 = vmatpush.bf16.msra.mxu0 0
        %484 = vmatpush.bf16.msra.mxu0 0
        %485 = vmatpush.bf16.msra.mxu0 0
        %486 = vmatpush.bf16.msra.mxu0 0
        %487 = vmatpush.bf16.msra.mxu0 0
        %488 = vmatpush.bf16.msra.mxu0 0
        %489 = vmatpush.bf16.msra.mxu0 0
        %490 = vmatpush.bf16.msra.mxu0 %v370
        %491 = vmatmul.bf16.gmra.mxu0 %v345
        %v492 = vpop.f32.mrf.mxu0
        %v493 = vadd.f32 %v323, %v492
        %v494 = vpop.f32.mrf.mxu0
        %v495 = vadd.f32 %v328, %v494
        %496 = vmatmul.bf16.gmra.mxu0 %v348
        %v497 = vpop.f32.mrf.mxu0
        %v498 = vadd.f32 %v333, %v497
        %v499 = vpop.f32.mrf.mxu0
        %500 = vdwg.mxu0
        %501 = vmatpush.bf16.msra.mxu0 0
        %502 = vmatpush.bf16.msra.mxu0 0
        %503 = vmatpush.bf16.msra.mxu0 0
        %504 = vmatpush.bf16.msra.mxu0 0
        %505 = vmatpush.bf16.msra.mxu0 0
        %506 = vmatpush.bf16.msra.mxu0 0
        %507 = vmatpush.bf16.msra.mxu0 0
        %508 = vmatpush.bf16.msra.mxu0 %v373
        %509 = vmatmul.bf16.gmra.mxu0 %v345
        %v510 = vpop.f32.mrf.mxu0
        %v511 = vadd.f32 %v323, %v510
        %v512 = vpop.f32.mrf.mxu0
        %v513 = vadd.f32 %v328, %v512
        %514 = vmatmul.bf16.gmra.mxu0 %v348
        %v515 = vpop.f32.mrf.mxu0
        %v516 = vadd.f32 %v333, %v515
        %v517 = vpop.f32.mrf.mxu0
        %518 = vdwg.mxu0
        %v519 = vmax.f32 %v385, 0.0
        %v520 = vmax.f32 %v403, 0.0
        %v521 = vmax.f32 %v421, 0.0
        %v522 = vmax.f32 %v439, 0.0
        %v523 = vmax.f32 %v457, 0.0
        %v524 = vmax.f32 %v475, 0.0
        %v525 = vmax.f32 %v493, 0.0
        %v526 = vmax.f32 %v511, 0.0
        %v527 = vmax.f32 %v387, 0.0
        %v528 = vmax.f32 %v405, 0.0
        %v529 = vmax.f32 %v423, 0.0
        %v530 = vmax.f32 %v441, 0.0
        %v531 = vmax.f32 %v459, 0.0
        %v532 = vmax.f32 %v477, 0.0
        %v533 = vmax.f32 %v495, 0.0
        %v534 = vmax.f32 %v513, 0.0
        %v535 = vmax.f32 %v390, 0.0
        %v536 = vmax.f32 %v408, 0.0
        %v537 = vmax.f32 %v426, 0.0
        %v538 = vmax.f32 %v444, 0.0
        %v539 = vmax.f32 %v462, 0.0
        %v540 = vmax.f32 %v480, 0.0
        %v541 = vmax.f32 %v498, 0.0
        %v542 = vmax.f32 %v516, 0.0
        %v543 = vpack.c.bf16 %v527, %v519
        %v544 = vpack.c.bf16 %v528, %v520
        %v545 = vpack.c.bf16 %v529, %v521
        %v546 = vpack.c.bf16 %v530, %v522
        %v547 = vpack.c.bf16 %v531, %v523
        %v548 = vpack.c.bf16 %v532, %v524
        %v549 = vpack.c.bf16 %v533, %v525
        %v550 = vpack.c.bf16 %v534, %v526
        %v551 = vpack.c.bf16 %v535, %v535
        %v552 = vpack.c.bf16 %v536, %v536
        %v553 = vpack.c.bf16 %v537, %v537
        %v554 = vpack.c.bf16 %v538, %v538
        %v555 = vpack.c.bf16 %v539, %v539
        %v556 = vpack.c.bf16 %v540, %v540
        %v557 = vpack.c.bf16 %v541, %v541
        %v558 = vpack.c.bf16 %v542, %v542
        %v559 = vld [vmem:[%s3] sm:$0xf]
        %v560 = vld [vmem:[%s3 + $0x4] sm:$0xf]
        %v561 = vld [vmem:[%s3 + $0x8] sm:$0x3]
        %v562 = vld [vmem:[%s4] sm:$0xff]
        %v563 = vld [vmem:[%s4 + $0x8] sm:$0xff]
        %v564 = vld [vmem:[%s4 + $0x10] sm:$0xf]
        %566 = vset.pattern.permute.xlu0 0
        %567 = vperm.xlu0 %566, %v562
        %v568 = vpop.permute.xlu0 %567
        %571 = vset.pattern.permute.xlu0 0
        %572 = vperm.xlu0 %571, %v563
        %v573 = vpop.permute.xlu0 %572
        %576 = vset.pattern.permute.xlu0 0
        %577 = vperm.xlu0 %576, %v564
        %v578 = vpop.permute.xlu0 %577
        %v583 = vunpack.c.l.b16 %v559
        %v584 = vunpack.c.l.b16 %v560
        %v585 = vunpack.c.l.b16 %v561
        %v586 = vpack.c.b16 %v584, %v583
        %v587 = vpack.c.b16 %v585, %v585
        %vm588 = vcmask 162816
        %v590 = vsel %vm588, %v586, 0
        %v593 = vsel %vm588, %v587, 0
        %vm595 = vcmask 1041408
        %v597 = vsel %vm595, %v551, 0
        %v600 = vsel %vm595, %v552, 0
        %v603 = vsel %vm595, %v553, 0
        %v606 = vsel %vm595, %v554, 0
        %v609 = vsel %vm595, %v555, 0
        %v612 = vsel %vm595, %v556, 0
        %v615 = vsel %vm595, %v557, 0
        %v618 = vsel %vm595, %v558, 0
        %620 = vmatpush.bf16.msra.mxu0 0
        %621 = vmatpush.bf16.msra.mxu0 0
        %622 = vmatpush.bf16.msra.mxu0 0
        %623 = vmatpush.bf16.msra.mxu0 0
        %624 = vmatpush.bf16.msra.mxu0 0
        %625 = vmatpush.bf16.msra.mxu0 0
        %626 = vmatpush.bf16.msra.mxu0 %v597
        %627 = vmatpush.bf16.msra.mxu0 %v543
        %628 = vmatmul.bf16.gmra.mxu0 %v590
        %v629 = vpop.f32.mrf.mxu0
        %v630 = vadd.f32 %v568, %v629
        %v631 = vpop.f32.mrf.mxu0
        %v632 = vadd.f32 %v573, %v631
        %633 = vmatmul.bf16.gmra.mxu0 %v593
        %v634 = vpop.f32.mrf.mxu0
        %v635 = vadd.f32 %v578, %v634
        %v636 = vpop.f32.mrf.mxu0
        %637 = vdwg.mxu0
        %638 = vmatpush.bf16.msra.mxu0 0
        %639 = vmatpush.bf16.msra.mxu0 0
        %640 = vmatpush.bf16.msra.mxu0 0
        %641 = vmatpush.bf16.msra.mxu0 0
        %642 = vmatpush.bf16.msra.mxu0 0
        %643 = vmatpush.bf16.msra.mxu0 0
        %644 = vmatpush.bf16.msra.mxu0 %v600
        %645 = vmatpush.bf16.msra.mxu0 %v544
        %646 = vmatmul.bf16.gmra.mxu0 %v590
        %v647 = vpop.f32.mrf.mxu0
        %v648 = vadd.f32 %v568, %v647
        %v649 = vpop.f32.mrf.mxu0
        %v650 = vadd.f32 %v573, %v649
        %651 = vmatmul.bf16.gmra.mxu0 %v593
        %v652 = vpop.f32.mrf.mxu0
        %v653 = vadd.f32 %v578, %v652
        %v654 = vpop.f32.mrf.mxu0
        %655 = vdwg.mxu0
        %656 = vmatpush.bf16.msra.mxu0 0
        %657 = vmatpush.bf16.msra.mxu0 0
        %658 = vmatpush.bf16.msra.mxu0 0
        %659 = vmatpush.bf16.msra.mxu0 0
        %660 = vmatpush.bf16.msra.mxu0 0
        %661 = vmatpush.bf16.msra.mxu0 0
        %662 = vmatpush.bf16.msra.mxu0 %v603
        %663 = vmatpush.bf16.msra.mxu0 %v545
        %664 = vmatmul.bf16.gmra.mxu0 %v590
        %v665 = vpop.f32.mrf.mxu0
        %v666 = vadd.f32 %v568, %v665
        %v667 = vpop.f32.mrf.mxu0
        %v668 = vadd.f32 %v573, %v667
        %669 = vmatmul.bf16.gmra.mxu0 %v593
        %v670 = vpop.f32.mrf.mxu0
        %v671 = vadd.f32 %v578, %v670
        %v672 = vpop.f32.mrf.mxu0
        %673 = vdwg.mxu0
        %674 = vmatpush.bf16.msra.mxu0 0
        %675 = vmatpush.bf16.msra.mxu0 0
        %676 = vmatpush.bf16.msra.mxu0 0
        %677 = vmatpush.bf16.msra.mxu0 0
        %678 = vmatpush.bf16.msra.mxu0 0
        %679 = vmatpush.bf16.msra.mxu0 0
        %680 = vmatpush.bf16.msra.mxu0 %v606
        %681 = vmatpush.bf16.msra.mxu0 %v546
        %682 = vmatmul.bf16.gmra.mxu0 %v590
        %v683 = vpop.f32.mrf.mxu0
        %v684 = vadd.f32 %v568, %v683
        %v685 = vpop.f32.mrf.mxu0
        %v686 = vadd.f32 %v573, %v685
        %687 = vmatmul.bf16.gmra.mxu0 %v593
        %v688 = vpop.f32.mrf.mxu0
        %v689 = vadd.f32 %v578, %v688
        %v690 = vpop.f32.mrf.mxu0
        %691 = vdwg.mxu0
        %692 = vmatpush.bf16.msra.mxu0 0
        %693 = vmatpush.bf16.msra.mxu0 0
        %694 = vmatpush.bf16.msra.mxu0 0
        %695 = vmatpush.bf16.msra.mxu0 0
        %696 = vmatpush.bf16.msra.mxu0 0
        %697 = vmatpush.bf16.msra.mxu0 0
        %698 = vmatpush.bf16.msra.mxu0 %v609
        %699 = vmatpush.bf16.msra.mxu0 %v547
        %700 = vmatmul.bf16.gmra.mxu0 %v590
        %v701 = vpop.f32.mrf.mxu0
        %v702 = vadd.f32 %v568, %v701
        %v703 = vpop.f32.mrf.mxu0
        %v704 = vadd.f32 %v573, %v703
        %705 = vmatmul.bf16.gmra.mxu0 %v593
        %v706 = vpop.f32.mrf.mxu0
        %v707 = vadd.f32 %v578, %v706
        %v708 = vpop.f32.mrf.mxu0
        %709 = vdwg.mxu0
        %710 = vmatpush.bf16.msra.mxu0 0
        %711 = vmatpush.bf16.msra.mxu0 0
        %712 = vmatpush.bf16.msra.mxu0 0
        %713 = vmatpush.bf16.msra.mxu0 0
        %714 = vmatpush.bf16.msra.mxu0 0
        %715 = vmatpush.bf16.msra.mxu0 0
        %716 = vmatpush.bf16.msra.mxu0 %v612
        %717 = vmatpush.bf16.msra.mxu0 %v548
        %718 = vmatmul.bf16.gmra.mxu0 %v590
        %v719 = vpop.f32.mrf.mxu0
        %v720 = vadd.f32 %v568, %v719
        %v721 = vpop.f32.mrf.mxu0
        %v722 = vadd.f32 %v573, %v721
        %723 = vmatmul.bf16.gmra.mxu0 %v593
        %v724 = vpop.f32.mrf.mxu0
        %v725 = vadd.f32 %v578, %v724
        %v726 = vpop.f32.mrf.mxu0
        %727 = vdwg.mxu0
        %728 = vmatpush.bf16.msra.mxu0 0
        %729 = vmatpush.bf16.msra.mxu0 0
        %730 = vmatpush.bf16.msra.mxu0 0
        %731 = vmatpush.bf16.msra.mxu0 0
        %732 = vmatpush.bf16.msra.mxu0 0
        %733 = vmatpush.bf16.msra.mxu0 0
        %734 = vmatpush.bf16.msra.mxu0 %v615
        %735 = vmatpush.bf16.msra.mxu0 %v549
        %736 = vmatmul.bf16.gmra.mxu0 %v590
        %v737 = vpop.f32.mrf.mxu0
        %v738 = vadd.f32 %v568, %v737
        %v739 = vpop.f32.mrf.mxu0
        %v740 = vadd.f32 %v573, %v739
        %741 = vmatmul.bf16.gmra.mxu0 %v593
        %v742 = vpop.f32.mrf.mxu0
        %v743 = vadd.f32 %v578, %v742
        %v744 = vpop.f32.mrf.mxu0
        %745 = vdwg.mxu0
        %746 = vmatpush.bf16.msra.mxu0 0
        %747 = vmatpush.bf16.msra.mxu0 0
        %748 = vmatpush.bf16.msra.mxu0 0
        %749 = vmatpush.bf16.msra.mxu0 0
        %750 = vmatpush.bf16.msra.mxu0 0
        %751 = vmatpush.bf16.msra.mxu0 0
        %752 = vmatpush.bf16.msra.mxu0 %v618
        %753 = vmatpush.bf16.msra.mxu0 %v550
        %754 = vmatmul.bf16.gmra.mxu0 %v590
        %v755 = vpop.f32.mrf.mxu0
        %v756 = vadd.f32 %v568, %v755
        %v757 = vpop.f32.mrf.mxu0
        %v758 = vadd.f32 %v573, %v757
        %759 = vmatmul.bf16.gmra.mxu0 %v593
        %v760 = vpop.f32.mrf.mxu0
        %v761 = vadd.f32 %v578, %v760
        %v762 = vpop.f32.mrf.mxu0
        %763 = vdwg.mxu0
        %v764 = vmax.f32 %v630, 0.0
        %v765 = vmax.f32 %v648, 0.0
        %v766 = vmax.f32 %v666, 0.0
        %v767 = vmax.f32 %v684, 0.0
        %v768 = vmax.f32 %v702, 0.0
        %v769 = vmax.f32 %v720, 0.0
        %v770 = vmax.f32 %v738, 0.0
        %v771 = vmax.f32 %v756, 0.0
        %v772 = vmax.f32 %v632, 0.0
        %v773 = vmax.f32 %v650, 0.0
        %v774 = vmax.f32 %v668, 0.0
        %v775 = vmax.f32 %v686, 0.0
        %v776 = vmax.f32 %v704, 0.0
        %v777 = vmax.f32 %v722, 0.0
        %v778 = vmax.f32 %v740, 0.0
        %v779 = vmax.f32 %v758, 0.0
        %v780 = vmax.f32 %v635, 0.0
        %v781 = vmax.f32 %v653, 0.0
        %v782 = vmax.f32 %v671, 0.0
        %v783 = vmax.f32 %v689, 0.0
        %v784 = vmax.f32 %v707, 0.0
        %v785 = vmax.f32 %v725, 0.0
        %v786 = vmax.f32 %v743, 0.0
        %v787 = vmax.f32 %v761, 0.0
        %v788 = vpack.c.bf16 %v772, %v764
        %v789 = vpack.c.bf16 %v773, %v765
        %v790 = vpack.c.bf16 %v774, %v766
        %v791 = vpack.c.bf16 %v775, %v767
        %v792 = vpack.c.bf16 %v776, %v768
        %v793 = vpack.c.bf16 %v777, %v769
        %v794 = vpack.c.bf16 %v778, %v770
        %v795 = vpack.c.bf16 %v779, %v771
        %v796 = vpack.c.bf16 %v780, %v780
        %v797 = vpack.c.bf16 %v781, %v781
        %v798 = vpack.c.bf16 %v782, %v782
        %v799 = vpack.c.bf16 %v783, %v783
        %v800 = vpack.c.bf16 %v784, %v784
        %v801 = vpack.c.bf16 %v785, %v785
        %v802 = vpack.c.bf16 %v786, %v786
        %v803 = vpack.c.bf16 %v787, %v787
        %v804 = vld [vmem:[%s5] sm:$0x1]
        %v805 = vld [vmem:[#allocation2] sm:$0x1]
        %807 = vset.pattern.permute.xlu0 0
        %808 = vperm.xlu0 %807, %v805
        %v809 = vpop.permute.xlu0 %808
        %v811 = vperm.slane %v809, 0
        %v813 = vsel %vm588, %v804, 0
        %v816 = vsel %vm595, %v796, 0
        %v819 = vsel %vm595, %v797, 0
        %v822 = vsel %vm595, %v798, 0
        %v825 = vsel %vm595, %v799, 0
        %v828 = vsel %vm595, %v800, 0
        %v831 = vsel %vm595, %v801, 0
        %v834 = vsel %vm595, %v802, 0
        %v837 = vsel %vm595, %v803, 0
        %839 = vmatpush.bf16.msra.mxu0 0
        %840 = vmatpush.bf16.msra.mxu0 0
        %841 = vmatpush.bf16.msra.mxu0 0
        %842 = vmatpush.bf16.msra.mxu0 0
        %843 = vmatpush.bf16.msra.mxu0 0
        %844 = vmatpush.bf16.msra.mxu0 0
        %845 = vmatpush.bf16.msra.mxu0 %v816
        %846 = vmatpush.bf16.msra.mxu0 %v788
        %847 = vmatmul.bf16.gmra.mxu0 %v813
        %v848 = vpop.f32.mrf.mxu0
        %v849 = vadd.f32 %v811, %v848
        %v850 = vpop.f32.mrf.mxu0
        %851 = vdwg.mxu0
        %852 = vmatpush.bf16.msra.mxu0 0
        %853 = vmatpush.bf16.msra.mxu0 0
        %854 = vmatpush.bf16.msra.mxu0 0
        %855 = vmatpush.bf16.msra.mxu0 0
        %856 = vmatpush.bf16.msra.mxu0 0
        %857 = vmatpush.bf16.msra.mxu0 0
        %858 = vmatpush.bf16.msra.mxu0 %v819
        %859 = vmatpush.bf16.msra.mxu0 %v789
        %860 = vmatmul.bf16.gmra.mxu0 %v813
        %v861 = vpop.f32.mrf.mxu0
        %v862 = vadd.f32 %v811, %v861
        %v863 = vpop.f32.mrf.mxu0
        %864 = vdwg.mxu0
        %865 = vmatpush.bf16.msra.mxu0 0
        %866 = vmatpush.bf16.msra.mxu0 0
        %867 = vmatpush.bf16.msra.mxu0 0
        %868 = vmatpush.bf16.msra.mxu0 0
        %869 = vmatpush.bf16.msra.mxu0 0
        %870 = vmatpush.bf16.msra.mxu0 0
        %871 = vmatpush.bf16.msra.mxu0 %v822
        %872 = vmatpush.bf16.msra.mxu0 %v790
        %873 = vmatmul.bf16.gmra.mxu0 %v813
        %v874 = vpop.f32.mrf.mxu0
        %v875 = vadd.f32 %v811, %v874
        %v876 = vpop.f32.mrf.mxu0
        %877 = vdwg.mxu0
        %878 = vmatpush.bf16.msra.mxu0 0
        %879 = vmatpush.bf16.msra.mxu0 0
        %880 = vmatpush.bf16.msra.mxu0 0
        %881 = vmatpush.bf16.msra.mxu0 0
        %882 = vmatpush.bf16.msra.mxu0 0
        %883 = vmatpush.bf16.msra.mxu0 0
        %884 = vmatpush.bf16.msra.mxu0 %v825
        %885 = vmatpush.bf16.msra.mxu0 %v791
        %886 = vmatmul.bf16.gmra.mxu0 %v813
        %v887 = vpop.f32.mrf.mxu0
        %v888 = vadd.f32 %v811, %v887
        %v889 = vpop.f32.mrf.mxu0
        %890 = vdwg.mxu0
        %891 = vmatpush.bf16.msra.mxu0 0
        %892 = vmatpush.bf16.msra.mxu0 0
        %893 = vmatpush.bf16.msra.mxu0 0
        %894 = vmatpush.bf16.msra.mxu0 0
        %895 = vmatpush.bf16.msra.mxu0 0
        %896 = vmatpush.bf16.msra.mxu0 0
        %897 = vmatpush.bf16.msra.mxu0 %v828
        %898 = vmatpush.bf16.msra.mxu0 %v792
        %899 = vmatmul.bf16.gmra.mxu0 %v813
        %v900 = vpop.f32.mrf.mxu0
        %v901 = vadd.f32 %v811, %v900
        %v902 = vpop.f32.mrf.mxu0
        %903 = vdwg.mxu0
        %904 = vmatpush.bf16.msra.mxu0 0
        %905 = vmatpush.bf16.msra.mxu0 0
        %906 = vmatpush.bf16.msra.mxu0 0
        %907 = vmatpush.bf16.msra.mxu0 0
        %908 = vmatpush.bf16.msra.mxu0 0
        %909 = vmatpush.bf16.msra.mxu0 0
        %910 = vmatpush.bf16.msra.mxu0 %v831
        %911 = vmatpush.bf16.msra.mxu0 %v793
        %912 = vmatmul.bf16.gmra.mxu0 %v813
        %v913 = vpop.f32.mrf.mxu0
        %v914 = vadd.f32 %v811, %v913
        %v915 = vpop.f32.mrf.mxu0
        %916 = vdwg.mxu0
        %917 = vmatpush.bf16.msra.mxu0 0
        %918 = vmatpush.bf16.msra.mxu0 0
        %919 = vmatpush.bf16.msra.mxu0 0
        %920 = vmatpush.bf16.msra.mxu0 0
        %921 = vmatpush.bf16.msra.mxu0 0
        %922 = vmatpush.bf16.msra.mxu0 0
        %923 = vmatpush.bf16.msra.mxu0 %v834
        %924 = vmatpush.bf16.msra.mxu0 %v794
        %925 = vmatmul.bf16.gmra.mxu0 %v813
        %v926 = vpop.f32.mrf.mxu0
        %v927 = vadd.f32 %v811, %v926
        %v928 = vpop.f32.mrf.mxu0
        %929 = vdwg.mxu0
        %930 = vmatpush.bf16.msra.mxu0 0
        %931 = vmatpush.bf16.msra.mxu0 0
        %932 = vmatpush.bf16.msra.mxu0 0
        %933 = vmatpush.bf16.msra.mxu0 0
        %934 = vmatpush.bf16.msra.mxu0 0
        %935 = vmatpush.bf16.msra.mxu0 0
        %936 = vmatpush.bf16.msra.mxu0 %v837
        %937 = vmatpush.bf16.msra.mxu0 %v795
        %938 = vmatmul.bf16.gmra.mxu0 %v813
        %v939 = vpop.f32.mrf.mxu0
        %v940 = vadd.f32 %v811, %v939
        %v941 = vpop.f32.mrf.mxu0
        %942 = vdwg.mxu0
        %v951 = vrot.slane %v862, 7
        %v952 = vrot.slane %v875, 6
        %v953 = vrot.slane %v888, 5
        %v954 = vrot.slane %v901, 4
        %v955 = vrot.slane %v914, 3
        %v956 = vrot.slane %v927, 2
        %v957 = vrot.slane %v940, 1
        %v958 = vsel %vm350, %v849, %v951
        %vm959 = vcmask 1042434
        %v960 = vsel %vm959, %v952, %v953
        %v961 = vsel %vm595, %v958, %v960
        %vm962 = vcmask 1044484
        %v963 = vsel %vm962, %v954, %v955
        %vm964 = vcmask 1046534
        %v965 = vsel %vm964, %v956, %v957
        %vm966 = vcmask 1045508
        %v967 = vsel %vm966, %v963, %v965
        %vm968 = vcmask 1043456
        %v969 = vsel %vm968, %v961, %v967
        %971 = vst [vmem:[%s274] sm:$0xff] %v969
        %s972 = sand.u32 %s183, 1
        %s973 = scalar_lea.sflag [#allocation4], %s972
        %s974 = sand.u32 %s183, 1
        %s975 = smul.addr %s974, 8
        %s976 = scalar_lea.vmem [#allocation3], %s975
        // Predicated region
        $region49: #{tpu_custom_call.1} parent=47 // pred_check
          %p977 = pneg %p193
        $region50: #{tpu_custom_call.1} parent=47 // pred_check_branch
          %979 = sbr.rel (%p977) target = $region52
        $region51: #{tpu_custom_call.1} parent=47 // pred_region
          %s980 = smul.u32 8, %s23
          %982 = vsyncadd %s973, 0
          %s983 = scalar_lea.hbm %s7, %s980
          %s985 = sshll.u32 %s976, 4
          %s986 = int_to_ptr.vmem [resolvable:$true] %s985
          %s987 = sshll.u32 %s983, 4
          %s988 = int_to_ptr.hbm [resolvable:$true] %s987
          %990 = dma.vmem_to_hbm [thread:$0]  %s986, 128, %s988, %s973
        $region52: #{tpu_custom_call.1} parent=47 // pred_fallthru
          _
      $region48: #{tpu_custom_call.1} parent=5 // pred_fallthru
        _
      %p991 = scmp.le.s32.totalorder 2, %s18
      // Predicated region
      $region53: #{tpu_custom_call.1} parent=5 // pred_check
        %p992 = pneg %p991
      $region54: #{tpu_custom_call.1} parent=5 // pred_check_branch
        %994 = sbr.rel (%p992) target = $region56
      $region55: #{tpu_custom_call.1} parent=5 // pred_region
        %s995 = ssub.s32 %s18, 2
        // Predicated region
        $region57: #{tpu_custom_call.1} parent=55 // pred_check
          %p996 = pneg %p199
        $region58: #{tpu_custom_call.1} parent=55 // pred_check_branch
          %998 = sbr.rel (%p996) target = $region60
        $region59: #{tpu_custom_call.1} parent=55 // pred_region
          %s999 = sand.u32 %s184, 1
          %s1000 = scalar_lea.sflag [#allocation4], %s999
          %s1001 = sand.u32 %s184, 1
          %s1002 = smul.addr %s1001, 8
          %s1003 = scalar_lea.vmem [#allocation3], %s1002
          %1005 = dma.done %s1000, 128
        $region60: #{tpu_custom_call.1} parent=55 // pred_fallthru
          _
      $region56: #{tpu_custom_call.1} parent=5 // pred_fallthru
        _
    $region6: #{tpu_custom_call.1} parent=1 // loop_footer
      %s22 = sadd.s32 1, %s18
    $region7: #{tpu_custom_call.1} parent=1 // loop_footer_branch
      %17 = sbr.rel target = $region3
    $region8: #{tpu_custom_call.1} parent=1 // loop_exit
      _
    %1006 = vsyncpa [#allocation4], 1
    %s1007 = scalar_lea.sflag [#allocation4], 1
    %1008 = vsyncpa %s1007, 1

</llo_original>
